<compile_context>
chip_gen: v5e
topology: v5e:2x2
jax: 0.10.0
libtpu: 0.0.40
codegen_flags: <defaults>
</compile_context>

<pallas_src>
import functools
import math

import jax
import jax.numpy as jnp
from jax.experimental import pallas as pl
from jax.experimental.pallas import tpu as pltpu

D_INPUT = 3
N_FREQS = 10
LOG_SPACE = True
D_OUTPUT = D_INPUT * (1 + 2 * N_FREQS)            # 63
D_PAD = ((D_OUTPUT + 7) // 8) * 8                 # 64: 8-sublane-aligned row count

if LOG_SPACE:
    FREQ_BANDS = tuple(float(2.0 ** k) for k in range(N_FREQS))
else:
    lo, hi = 2.0 ** 0.0, 2.0 ** (N_FREQS - 1)
    FREQ_BANDS = tuple(float(lo + k * (hi - lo) / (N_FREQS - 1)) for k in range(N_FREQS))

HALF_PI = float(math.pi / 2.0)

MAX_TILE_N = 8192     # points per grid step (lane axis)
SPLIT_MIN_N = 2048    # above this, force >= 2 grid steps (keeps both v7x TCs busy)


def _round_up(x, m):
    return ((x + m - 1) // m) * m


def _cdiv(a, b):
    return (a + b - 1) // b


def posenc_kernel(x_ref, out_ref):
    # x_ref:   (3,  TILE)  feature-major (points on lanes -> lane-dense)
    # out_ref: (64, TILE)  rows 0..62 = output features, row 63 = padding
    x = x_ref[...]

    if LOG_SPACE:
        # Two trig anchors (k=0 and k=k2); all other octaves via double-angle.
        k2 = N_FREQS // 2
        f2 = float(2.0 ** k2)
        z = jnp.concatenate(
            [x, x + HALF_PI, x * f2, x * f2 + HALF_PI], axis=0)    # (12, TILE)
        sc = jnp.sin(z)                                            # one dense poly pass
        s, c = sc[0:D_INPUT], sc[D_INPUT:2 * D_INPUT]
        s2, c2 = sc[2 * D_INPUT:3 * D_INPUT], sc[3 * D_INPUT:4 * D_INPUT]

        sins = [None] * N_FREQS
        coss = [None] * N_FREQS
        sins[0], coss[0] = s, c
        for k in range(1, k2):
            s, c = 2.0 * s * c, 1.0 - 2.0 * (s * s)
            sins[k], coss[k] = s, c
        sins[k2], coss[k2] = s2, c2
        for k in range(k2 + 1, N_FREQS):
            s2, c2 = 2.0 * s2 * c2, 1.0 - 2.0 * (s2 * s2)
            sins[k], coss[k] = s2, c2
    else:
        # Generic (non-log-space) fallback: still assembled into one store.
        sins = [jnp.sin(x * f) for f in FREQ_BANDS]
        coss = [jnp.cos(x * f) for f in FREQ_BANDS]

    parts = [x]
    for k in range(N_FREQS):
        parts.append(sins[k])
        parts.append(coss[k])
    if D_PAD > D_OUTPUT:
        parts.append(jnp.zeros((D_PAD - D_OUTPUT,) + x.shape[1:], x.dtype))

    # Single aligned (64, TILE) store instead of 21 misaligned 3-row stores.
    out_ref[...] = jnp.concatenate(parts, axis=0)


@functools.partial(jax.jit, static_argnames=("feature_major",))
def positional_encoder(x, feature_major=False):
    """x: [..., 3] -> [..., 63] (or (63, N) feature-major if feature_major=True)."""
    lead = x.shape[:-1]
    xf = x.reshape(-1, D_INPUT).astype(jnp.float32)
    n = xf.shape[0]

    n128 = _round_up(max(n, 1), 128)
    grid_n = _cdiv(n128, MAX_TILE_N)
    if n128 >= SPLIT_MIN_N:
        grid_n = max(grid_n, 2)                 # shard across both v7x TensorCores
    tile = _round_up(_cdiv(n128, grid_n), 128)  # <= MAX_TILE_N, multiple of 128
    n_pad = grid_n * tile                       # waste < 128 points per grid step

    xT = xf.T                                   # (3, n): cheap layout plumbing (12 B/pt)
    if n_pad != n:
        xT = jnp.pad(xT, ((0, 0), (0, n_pad - n)))

    yT = pl.pallas_call(
        posenc_kernel,
        out_shape=jax.ShapeDtypeStruct((D_PAD, n_pad), jnp.float32),
        grid_spec=pltpu.PrefetchScalarGridSpec(
            num_scalar_prefetch=0,
            grid=(grid_n,),
            in_specs=[pl.BlockSpec((D_INPUT, tile), lambda i: (0, i))],
            out_specs=pl.BlockSpec((D_PAD, tile), lambda i: (0, i)),
        ),
        compiler_params=pltpu.CompilerParams(
            dimension_semantics=("parallel",),
        ),
    )(xT)

    yT = yT[:D_OUTPUT, :n]                      # (63, N) feature-major
    if feature_major:
        # Fusion-friendly path: consumer contracts over axis 0, no transpose.
        return yT
    # PyTorch-compatible layout; in a full NeRF pipeline prefer feature_major=True
    # and fuse this layout change into the next matmul instead.
    return yT.T.reshape(*lead, D_OUTPUT)


def posenc_reference(x):
    parts = [x]
    for f in FREQ_BANDS:
        parts.append(jnp.sin(x * f))
        parts.append(jnp.cos(x * f))
    return jnp.concatenate(parts, axis=-1)


if __name__ == "__main__":
    key = jax.random.PRNGKey(0)
    # Small batch of NeRF-style normalized 3D points; 4*50=200 rows exercises
    # the ragged (non-multiple-of-128) padding path.
    x = jax.random.uniform(key, (4, 50, D_INPUT), jnp.float32, minval=-1.0, maxval=1.0)

    y = positional_encoder(x)
    y = jax.block_until_ready(y)

    y_ref = posenc_reference(x)
    assert y.shape == (4, 50, D_OUTPUT), y.shape
    err = float(jnp.max(jnp.abs(y - y_ref)))
    assert jnp.allclose(y, y_ref, atol=2e-3, rtol=2e-3), err

    # Also sanity-check the fusion-friendly feature-major path.
    yT = jax.block_until_ready(positional_encoder(x, feature_major=True))
    assert yT.shape == (D_OUTPUT, 4 * 50), yT.shape
    assert jnp.allclose(yT.T.reshape(4, 50, D_OUTPUT), y_ref, atol=2e-3, rtol=2e-3)

    print("KERNEL_OK")
</pallas_src>

<mosaic_0001>
module attributes {stable_mosaic.version = 11 : i64} {
  func.func @posenc_kernel(%arg0: i32, %arg1: memref<3x256xf32, #tpu.memory_space<vmem>>, %arg2: memref<64x256xf32, #tpu.memory_space<vmem>>) attributes {dimension_semantics = [#tpu.dimension_semantics<parallel>], iteration_bounds = array<i64: 1>, scalar_prefetch = 0 : i64, scratch_operands = 0 : i64, tpu.core_type = #tpu.core_type<tc>, window_params = [{transform_indices = @transform_0, window_bounds = array<i64: 3, 256>}, {transform_indices = @transform_1, window_bounds = array<i64: 64, 256>}]} {
    %c0 = arith.constant 0 : index
    %c0_0 = arith.constant 0 : index
    %0 = vector.load %arg1[%c0, %c0_0] : memref<3x256xf32, #tpu.memory_space<vmem>>, vector<3x256xf32>
    %cst = arith.constant 1.57079637 : f32
    %1 = vector.broadcast %cst : f32 to vector<3x256xf32>
    %2 = arith.addf %0, %1 : vector<3x256xf32>
    %cst_1 = arith.constant 3.200000e+01 : f32
    %3 = vector.broadcast %cst_1 : f32 to vector<3x256xf32>
    %4 = arith.mulf %0, %3 : vector<3x256xf32>
    %cst_2 = arith.constant 3.200000e+01 : f32
    %5 = vector.broadcast %cst_2 : f32 to vector<3x256xf32>
    %6 = arith.mulf %0, %5 : vector<3x256xf32>
    %cst_3 = arith.constant 1.57079637 : f32
    %7 = vector.broadcast %cst_3 : f32 to vector<3x256xf32>
    %8 = arith.addf %6, %7 : vector<3x256xf32>
    %9 = tpu.concatenate %0, %2, %4, %8 in 0 : vector<3x256xf32>, vector<3x256xf32>, vector<3x256xf32>, vector<3x256xf32> -> vector<12x256xf32>
    %10 = math.sin %9 : vector<12x256xf32>
    %11 = vector.extract_strided_slice %10 {offsets = [0, 0], sizes = [3, 256], strides = [1, 1]} : vector<12x256xf32> to vector<3x256xf32>
    %12 = vector.extract_strided_slice %10 {offsets = [3, 0], sizes = [3, 256], strides = [1, 1]} : vector<12x256xf32> to vector<3x256xf32>
    %13 = vector.extract_strided_slice %10 {offsets = [6, 0], sizes = [3, 256], strides = [1, 1]} : vector<12x256xf32> to vector<3x256xf32>
    %14 = vector.extract_strided_slice %10 {offsets = [9, 0], sizes = [3, 256], strides = [1, 1]} : vector<12x256xf32> to vector<3x256xf32>
    %cst_4 = arith.constant 2.000000e+00 : f32
    %15 = vector.broadcast %cst_4 : f32 to vector<3x256xf32>
    %16 = arith.mulf %15, %11 : vector<3x256xf32>
    %17 = arith.mulf %16, %12 : vector<3x256xf32>
    %18 = arith.mulf %11, %11 : vector<3x256xf32>
    %cst_5 = arith.constant 2.000000e+00 : f32
    %19 = vector.broadcast %cst_5 : f32 to vector<3x256xf32>
    %20 = arith.mulf %19, %18 : vector<3x256xf32>
    %cst_6 = arith.constant 1.000000e+00 : f32
    %21 = vector.broadcast %cst_6 : f32 to vector<3x256xf32>
    %22 = arith.subf %21, %20 : vector<3x256xf32>
    %cst_7 = arith.constant 2.000000e+00 : f32
    %23 = vector.broadcast %cst_7 : f32 to vector<3x256xf32>
    %24 = arith.mulf %23, %17 : vector<3x256xf32>
    %25 = arith.mulf %24, %22 : vector<3x256xf32>
    %26 = arith.mulf %17, %17 : vector<3x256xf32>
    %cst_8 = arith.constant 2.000000e+00 : f32
    %27 = vector.broadcast %cst_8 : f32 to vector<3x256xf32>
    %28 = arith.mulf %27, %26 : vector<3x256xf32>
    %cst_9 = arith.constant 1.000000e+00 : f32
    %29 = vector.broadcast %cst_9 : f32 to vector<3x256xf32>
    %30 = arith.subf %29, %28 : vector<3x256xf32>
    %cst_10 = arith.constant 2.000000e+00 : f32
    %31 = vector.broadcast %cst_10 : f32 to vector<3x256xf32>
    %32 = arith.mulf %31, %25 : vector<3x256xf32>
    %33 = arith.mulf %32, %30 : vector<3x256xf32>
    %34 = arith.mulf %25, %25 : vector<3x256xf32>
    %cst_11 = arith.constant 2.000000e+00 : f32
    %35 = vector.broadcast %cst_11 : f32 to vector<3x256xf32>
    %36 = arith.mulf %35, %34 : vector<3x256xf32>
    %cst_12 = arith.constant 1.000000e+00 : f32
    %37 = vector.broadcast %cst_12 : f32 to vector<3x256xf32>
    %38 = arith.subf %37, %36 : vector<3x256xf32>
    %cst_13 = arith.constant 2.000000e+00 : f32
    %39 = vector.broadcast %cst_13 : f32 to vector<3x256xf32>
    %40 = arith.mulf %39, %33 : vector<3x256xf32>
    %41 = arith.mulf %40, %38 : vector<3x256xf32>
    %42 = arith.mulf %33, %33 : vector<3x256xf32>
    %cst_14 = arith.constant 2.000000e+00 : f32
    %43 = vector.broadcast %cst_14 : f32 to vector<3x256xf32>
    %44 = arith.mulf %43, %42 : vector<3x256xf32>
    %cst_15 = arith.constant 1.000000e+00 : f32
    %45 = vector.broadcast %cst_15 : f32 to vector<3x256xf32>
    %46 = arith.subf %45, %44 : vector<3x256xf32>
    %cst_16 = arith.constant 2.000000e+00 : f32
    %47 = vector.broadcast %cst_16 : f32 to vector<3x256xf32>
    %48 = arith.mulf %47, %13 : vector<3x256xf32>
    %49 = arith.mulf %48, %14 : vector<3x256xf32>
    %50 = arith.mulf %13, %13 : vector<3x256xf32>
    %cst_17 = arith.constant 2.000000e+00 : f32
    %51 = vector.broadcast %cst_17 : f32 to vector<3x256xf32>
    %52 = arith.mulf %51, %50 : vector<3x256xf32>
    %cst_18 = arith.constant 1.000000e+00 : f32
    %53 = vector.broadcast %cst_18 : f32 to vector<3x256xf32>
    %54 = arith.subf %53, %52 : vector<3x256xf32>
    %cst_19 = arith.constant 2.000000e+00 : f32
    %55 = vector.broadcast %cst_19 : f32 to vector<3x256xf32>
    %56 = arith.mulf %55, %49 : vector<3x256xf32>
    %57 = arith.mulf %56, %54 : vector<3x256xf32>
    %58 = arith.mulf %49, %49 : vector<3x256xf32>
    %cst_20 = arith.constant 2.000000e+00 : f32
    %59 = vector.broadcast %cst_20 : f32 to vector<3x256xf32>
    %60 = arith.mulf %59, %58 : vector<3x256xf32>
    %cst_21 = arith.constant 1.000000e+00 : f32
    %61 = vector.broadcast %cst_21 : f32 to vector<3x256xf32>
    %62 = arith.subf %61, %60 : vector<3x256xf32>
    %cst_22 = arith.constant 2.000000e+00 : f32
    %63 = vector.broadcast %cst_22 : f32 to vector<3x256xf32>
    %64 = arith.mulf %63, %57 : vector<3x256xf32>
    %65 = arith.mulf %64, %62 : vector<3x256xf32>
    %66 = arith.mulf %57, %57 : vector<3x256xf32>
    %cst_23 = arith.constant 2.000000e+00 : f32
    %67 = vector.broadcast %cst_23 : f32 to vector<3x256xf32>
    %68 = arith.mulf %67, %66 : vector<3x256xf32>
    %cst_24 = arith.constant 1.000000e+00 : f32
    %69 = vector.broadcast %cst_24 : f32 to vector<3x256xf32>
    %70 = arith.subf %69, %68 : vector<3x256xf32>
    %cst_25 = arith.constant 2.000000e+00 : f32
    %71 = vector.broadcast %cst_25 : f32 to vector<3x256xf32>
    %72 = arith.mulf %71, %65 : vector<3x256xf32>
    %73 = arith.mulf %72, %70 : vector<3x256xf32>
    %74 = arith.mulf %65, %65 : vector<3x256xf32>
    %cst_26 = arith.constant 2.000000e+00 : f32
    %75 = vector.broadcast %cst_26 : f32 to vector<3x256xf32>
    %76 = arith.mulf %75, %74 : vector<3x256xf32>
    %cst_27 = arith.constant 1.000000e+00 : f32
    %77 = vector.broadcast %cst_27 : f32 to vector<3x256xf32>
    %78 = arith.subf %77, %76 : vector<3x256xf32>
    %cst_28 = arith.constant 0.000000e+00 : f32
    %79 = vector.broadcast %cst_28 : f32 to vector<1x256xf32>
    %80 = tpu.concatenate %0, %11, %12, %17, %22, %25, %30, %33, %38, %41, %46, %13, %14, %49, %54, %57 in 0 : vector<3x256xf32>, vector<3x256xf32>, vector<3x256xf32>, vector<3x256xf32>, vector<3x256xf32>, vector<3x256xf32>, vector<3x256xf32>, vector<3x256xf32>, vector<3x256xf32>, vector<3x256xf32>, vector<3x256xf32>, vector<3x256xf32>, vector<3x256xf32>, vector<3x256xf32>, vector<3x256xf32>, vector<3x256xf32> -> vector<48x256xf32>
    %81 = tpu.concatenate %62, %65, %70, %73, %78, %79 in 0 : vector<3x256xf32>, vector<3x256xf32>, vector<3x256xf32>, vector<3x256xf32>, vector<3x256xf32>, vector<1x256xf32> -> vector<16x256xf32>
    %82 = tpu.concatenate %80, %81 in 0 : vector<48x256xf32>, vector<16x256xf32> -> vector<64x256xf32>
    %c0_29 = arith.constant 0 : index
    %c0_30 = arith.constant 0 : index
    %83 = vector.load %arg2[%c0_29, %c0_30] : memref<64x256xf32, #tpu.memory_space<vmem>>, vector<64x256xf32>
    tpu.vector_store %arg2[%c0_29, %c0_30], %82 {strides = array<i32>} : memref<64x256xf32, #tpu.memory_space<vmem>>, vector<64x256xf32>,
    return
  }
  func.func @transform_0(%arg0: i32) -> (i32, i32) {
    %c0_i32 = arith.constant 0 : i32
    %c0_i32_0 = arith.constant 0 : i32
    return %c0_i32, %arg0 : i32, i32
  }
  func.func @transform_1(%arg0: i32) -> (i32, i32) {
    %c0_i32 = arith.constant 0 : i32
    %c0_i32_0 = arith.constant 0 : i32
    return %c0_i32, %arg0 : i32, i32
  }
}

</mosaic_0001>

<llo_original>
// kernel: positional_encoder.1
$region0: #{positional_encoder.1}
  #allocation0 [shape = 'u32[]', space=smem, size = 0x4, offset = 0x4, fixed_abs, tag = 'smem constant byte address 0x4 - core index']
  #allocation1 [shape = 'u32[72,128]{1,0:T(1,128)}', space=vmem, size = 0x9000, scoped, tag = 'internal scratch']
  %s0 = inlined_call_operand.vmem [shape: f32[3,256], index: 0, kind: input, shape index: {}]
  %s1 = inlined_call_operand.vmem [shape: f32[64,256], index: 1, kind: output, shape index: {}]
  %s2 = sld [smem:[#allocation0]]
  $region14: #{positional_encoder.1} parent=0
    _
  %s4 = ssub.s32 1, %s2
  %s5 = scalar_select 0, %s4, %s2
  // Predicated region
  $region2: #{positional_encoder.1} parent=0 // pred_check
    _
  $region3: #{positional_encoder.1} parent=0 // pred_check_branch
    %7 = sbr.rel (0) target = $region5
  $region4: #{positional_encoder.1} parent=0 // pred_region
    _
  $region5: #{positional_encoder.1} parent=0 // pred_fallthru
    _
  %v8 = vld [vmem:[%s0] sm:$0x77]
  %v9 = vadd.f32 %v8, 1.5707964
  %v10 = vmul.f32 %v8, 32.0
  %v11 = vadd.f32 %v10, 1.5707964
  %13 = vst [vmem:[#allocation1] ss:$2 sm:$0xff] %v8
  %v14 = vld.sshfl [vmem:[#allocation1] sm:$0xff pattern:$0x75316420]
  %v15 = vld.sshfl [vmem:[#allocation1 + $0x8] sm:$0xff pattern:$0x75316420]
  %19 = vst [vmem:[#allocation1] ss:$2 sm:$0xff] %v9
  %v20 = vld.sshfl [vmem:[#allocation1] sm:$0xff pattern:$0x75316420]
  %v21 = vld.sshfl [vmem:[#allocation1 + $0x8] sm:$0xff pattern:$0x75316420]
  %v22 = vrot.slane %v20, 5
  %v23 = vrot.slane %v21, 5
  %27 = vst [vmem:[#allocation1] ss:$2 sm:$0xff] %v10
  %v28 = vld.sshfl [vmem:[#allocation1] sm:$0xff pattern:$0x75316420]
  %v29 = vld.sshfl [vmem:[#allocation1 + $0x8] sm:$0xff pattern:$0x75316420]
  %v30 = vrot.slane %v28, 2
  %v31 = vrot.slane %v29, 2
  %35 = vst [vmem:[#allocation1] ss:$2 sm:$0xff] %v11
  %v36 = vld.sshfl [vmem:[#allocation1] sm:$0xff pattern:$0x75316420]
  %v37 = vld.sshfl [vmem:[#allocation1 + $0x8] sm:$0xff pattern:$0x75316420]
  %v38 = vrot.slane %v36, 7
  %v39 = vrot.slane %v37, 7
  %vm42 = vcmask 1042432
  %v43 = vsel %vm42, %v14, %v22
  %v44 = vsel %vm42, %v15, %v23
  %vm45 = vcmask 1045504
  %v46 = vsel %vm45, %v43, %v30
  %v47 = vsel %vm45, %v44, %v31
  %vm48 = vcmask 1040384
  %v49 = vsel %vm48, %v30, %v38
  %v50 = vsel %vm48, %v31, %v39
  %v51 = vand.u32 2147483647, %v46
  %vm52 = vcmp.le.f32.partialorder %v51, 0.7853982
  %vm53 = vcmp.lt.s32.totalorder %v46, 0
  %v54 = vand.u32 %v46, 2139095040
  %v55 = vshrl.u32 %v54, 23
  %v56 = vsub.s32 %v55, 127
  %v57 = vand.u32 2147483647, %v46
  %v58 = vand.u32 %v57, 8388607
  %v59 = vor.u32 %v58, 8388608
  %v60 = vsub.s32 0, %v59
  %v61 = vadd.s32 %v56, 1
  %vm62 = vcmp.gt.s32.totalorder %v61, 0
  %v63 = vsel %vm62, %v61, 0
  %v64 = vshrl.u32 %v63, 5
  %v65 = vand.u32 %v63, 31
  %v66 = vsub.s32 32, %v65
  %v67 = vshrl.u32 683565275, %v66
  %v68 = vshll.u32 683565275, %v65
  %v69 = vshrl.u32 2475754826, %v66
  %v70 = vor.u32 %v68, %v69
  %v71 = vshll.u32 2475754826, %v65
  %v72 = vshrl.u32 2131351028, %v66
  %v73 = vor.u32 %v71, %v72
  %v74 = vshll.u32 2131351028, %v65
  %v75 = vshrl.u32 2102212464, %v66
  %v76 = vor.u32 %v74, %v75
  %v77 = vshll.u32 2102212464, %v65
  %v78 = vshrl.u32 920167782, %v66
  %v79 = vor.u32 %v77, %v78
  %v80 = vshll.u32 920167782, %v65
  %v81 = vshrl.u32 1326507024, %v66
  %v82 = vor.u32 %v80, %v81
  %vm83 = vcmp.lt.s32.totalorder %v64, 1
  %vm84 = vcmp.lt.s32.totalorder %v64, 2
  %vm85 = vcmp.lt.s32.totalorder %v64, 3
  %vm86 = vcmp.lt.s32.totalorder %v64, 4
  %v87 = vsel %vm83, %v67, %v70
  %v88 = vsel %vm86, %v76, 2102212464
  %v89 = vsel %vm85, %v73, %v88
  %v90 = vsel %vm84, %v87, %v89
  %v91 = vsel %vm83, %v70, %v73
  %v92 = vsel %vm86, %v79, 920167782
  %v93 = vsel %vm85, %v76, %v92
  %v94 = vsel %vm84, %v91, %v93
  %v95 = vsel %vm83, %v73, %v76
  %v96 = vsel %vm86, %v82, 1326507024
  %v97 = vsel %vm85, %v79, %v96
  %v98 = vsel %vm84, %v95, %v97
  %v99 = vshll.u32 %v59, 8
  %v100 = vand.u32 %v99, 65535
  %v101 = vshrl.u32 %v99, 16
  %v102 = vand.u32 %v98, 65535
  %v103 = vshrl.u32 %v98, 16
  %v104 = vmul.u32 %v100, %v102
  %v105 = vmul.u32 %v100, %v103
  %v106 = vmul.u32 %v101, %v102
  %v107 = vmul.u32 %v101, %v103
  %v108 = vshll.u32 %v105, 16
  %v109 = vshrl.u32 %v105, 16
  %v110 = vshll.u32 %v106, 16
  %v111 = vshrl.u32 %v106, 16
  %vm112 = vc.u32 %v104, %v108
  %v113 = vsel %vm112, 1, 0
  %v114 = vadd.s32 %v104, %v108
  %v115 = vadd.s32 %v107, %v113
  %vm116 = vc.u32 %v114, %v110
  %v117 = vsel %vm116, 1, 0
  %v118 = vadd.s32 %v114, %v110
  %v119 = vadd.s32 %v115, %v117
  %v120 = vadd.s32 %v119, %v109
  %v121 = vadd.s32 %v120, %v111
  %v122 = vand.u32 %v99, 65535
  %v123 = vshrl.u32 %v99, 16
  %v124 = vand.u32 %v94, 65535
  %v125 = vshrl.u32 %v94, 16
  %v126 = vmul.u32 %v122, %v124
  %v127 = vmul.u32 %v122, %v125
  %v128 = vmul.u32 %v123, %v124
  %v129 = vmul.u32 %v123, %v125
  %v130 = vshll.u32 %v127, 16
  %v131 = vshrl.u32 %v127, 16
  %v132 = vshll.u32 %v128, 16
  %v133 = vshrl.u32 %v128, 16
  %vm134 = vc.u32 %v126, %v130
  %v135 = vsel %vm134, 1, 0
  %v136 = vadd.s32 %v126, %v130
  %v137 = vadd.s32 %v129, %v135
  %vm138 = vc.u32 %v136, %v132
  %v139 = vsel %vm138, 1, 0
  %v140 = vadd.s32 %v136, %v132
  %v141 = vadd.s32 %v137, %v139
  %v142 = vadd.s32 %v141, %v131
  %v143 = vadd.s32 %v142, %v133
  %v144 = vmul.u32 %v99, %v90
  %v145 = vadd.s32 %v121, %v140
  %vm146 = vc.u32 %v121, %v140
  %v147 = vadd.s32 %v143, 1
  %v148 = vsel %vm146, %v147, %v143
  %v149 = vadd.s32 %v144, %v148
  %v150 = vadd.s32 %v149, 536870912
  %v151 = vshrl.u32 %v150, 30
  %v152 = vshll.u32 %v151, 30
  %v153 = vsub.s32 %v149, %v152
  %vm154 = vcmp.lt.s32.totalorder %v153, 0
  %v155 = vsub.s32 0, %v153
  %v156 = vsel %vm154, %v155, %v153
  %v157 = vclz %v156
  %v158 = vsub.s32 %v157, 2
  %vm159 = vcmp.gt.s32.totalorder 0, %v158
  %v160 = vsel %vm159, 0, %v158
  %v161 = vsub.s32 32, %v160
  %v162 = vshll.u32 %v153, %v160
  %v163 = vshrl.u32 %v145, %v161
  %v164 = vor.u32 %v162, %v163
  %v165 = vsub.s32 4294967266, %v160
  %v166 = vadd.s32 %v165, 127
  %v167 = vshll.u32 %v166, 23
  %v168 = vor.u32 4788187, %v167
  %v169 = vand.u32 2147483647, %v168
  %v171 = vcvt.s32.f32 %v164
  %v172 = vmul.f32 %v171, %v169
  %v173 = vxor.u32 %v172, 2147483648
  %v174 = vsel %vm53, %v173, %v172
  %v175 = vsub.s32 4, %v151
  %v176 = vsel %vm53, %v175, %v151
  %v177 = vsel %vm52, %v46, %v174
  %v178 = vsel %vm52, 0, %v176
  %v179 = vmul.f32 %v177, %v177
  %v180 = vmul.f32 %v179, -0.001358992
  %v181 = vadd.f32 %v180, 0.041655596
  %v182 = vmul.f32 %v179, %v181
  %v183 = vadd.f32 %v182, -0.4999988
  %v184 = vmul.f32 %v179, %v183
  %v185 = vadd.f32 1.0, %v184
  %v186 = vmul.f32 %v177, %v177
  %v187 = vmul.f32 %v186, -0.00019511016
  %v188 = vadd.f32 %v187, 0.008332121
  %v189 = vmul.f32 %v186, %v188
  %v190 = vadd.f32 %v189, -0.16666654
  %v191 = vmul.f32 %v186, %v190
  %v192 = vadd.f32 %v191, 1.0
  %v193 = vmul.f32 %v192, %v177
  %vm194 = vweird.f32 %v46
  %v195 = vadd.s32 %v178, 3
  %v196 = vand.u32 %v195, 3
  %vm197 = vcmp.lt.s32.totalorder %v196, 2
  %vm198 = vcmp.eq.s32.totalorder %v196, 0
  %v199 = vxor.u32 %v193, 2147483648
  %v200 = vsel %vm198, %v185, %v199
  %vm201 = vcmp.eq.s32.totalorder %v196, 2
  %v202 = vxor.u32 %v185, 2147483648
  %v203 = vsel %vm201, %v202, %v193
  %v204 = vsel %vm197, %v200, %v203
  %v205 = vsel %vm194, nan, %v204
  %v206 = vand.u32 2147483647, %v47
  %vm207 = vcmp.le.f32.partialorder %v206, 0.7853982
  %vm208 = vcmp.lt.s32.totalorder %v47, 0
  %v209 = vand.u32 %v47, 2139095040
  %v210 = vshrl.u32 %v209, 23
  %v211 = vsub.s32 %v210, 127
  %v212 = vand.u32 2147483647, %v47
  %v213 = vand.u32 %v212, 8388607
  %v214 = vor.u32 %v213, 8388608
  %v215 = vsub.s32 0, %v214
  %v216 = vadd.s32 %v211, 1
  %vm217 = vcmp.gt.s32.totalorder %v216, 0
  %v218 = vsel %vm217, %v216, 0
  %v219 = vshrl.u32 %v218, 5
  %v220 = vand.u32 %v218, 31
  %v221 = vsub.s32 32, %v220
  %v222 = vshrl.u32 683565275, %v221
  %v223 = vshll.u32 683565275, %v220
  %v224 = vshrl.u32 2475754826, %v221
  %v225 = vor.u32 %v223, %v224
  %v226 = vshll.u32 2475754826, %v220
  %v227 = vshrl.u32 2131351028, %v221
  %v228 = vor.u32 %v226, %v227
  %v229 = vshll.u32 2131351028, %v220
  %v230 = vshrl.u32 2102212464, %v221
  %v231 = vor.u32 %v229, %v230
  %v232 = vshll.u32 2102212464, %v220
  %v233 = vshrl.u32 920167782, %v221
  %v234 = vor.u32 %v232, %v233
  %v235 = vshll.u32 920167782, %v220
  %v236 = vshrl.u32 1326507024, %v221
  %v237 = vor.u32 %v235, %v236
  %vm238 = vcmp.lt.s32.totalorder %v219, 1
  %vm239 = vcmp.lt.s32.totalorder %v219, 2
  %vm240 = vcmp.lt.s32.totalorder %v219, 3
  %vm241 = vcmp.lt.s32.totalorder %v219, 4
  %v242 = vsel %vm238, %v222, %v225
  %v243 = vsel %vm241, %v231, 2102212464
  %v244 = vsel %vm240, %v228, %v243
  %v245 = vsel %vm239, %v242, %v244
  %v246 = vsel %vm238, %v225, %v228
  %v247 = vsel %vm241, %v234, 920167782
  %v248 = vsel %vm240, %v231, %v247
  %v249 = vsel %vm239, %v246, %v248
  %v250 = vsel %vm238, %v228, %v231
  %v251 = vsel %vm241, %v237, 1326507024
  %v252 = vsel %vm240, %v234, %v251
  %v253 = vsel %vm239, %v250, %v252
  %v254 = vshll.u32 %v214, 8
  %v255 = vand.u32 %v254, 65535
  %v256 = vshrl.u32 %v254, 16
  %v257 = vand.u32 %v253, 65535
  %v258 = vshrl.u32 %v253, 16
  %v259 = vmul.u32 %v255, %v257
  %v260 = vmul.u32 %v255, %v258
  %v261 = vmul.u32 %v256, %v257
  %v262 = vmul.u32 %v256, %v258
  %v263 = vshll.u32 %v260, 16
  %v264 = vshrl.u32 %v260, 16
  %v265 = vshll.u32 %v261, 16
  %v266 = vshrl.u32 %v261, 16
  %vm267 = vc.u32 %v259, %v263
  %v268 = vsel %vm267, 1, 0
  %v269 = vadd.s32 %v259, %v263
  %v270 = vadd.s32 %v262, %v268
  %vm271 = vc.u32 %v269, %v265
  %v272 = vsel %vm271, 1, 0
  %v273 = vadd.s32 %v269, %v265
  %v274 = vadd.s32 %v270, %v272
  %v275 = vadd.s32 %v274, %v264
  %v276 = vadd.s32 %v275, %v266
  %v277 = vand.u32 %v254, 65535
  %v278 = vshrl.u32 %v254, 16
  %v279 = vand.u32 %v249, 65535
  %v280 = vshrl.u32 %v249, 16
  %v281 = vmul.u32 %v277, %v279
  %v282 = vmul.u32 %v277, %v280
  %v283 = vmul.u32 %v278, %v279
  %v284 = vmul.u32 %v278, %v280
  %v285 = vshll.u32 %v282, 16
  %v286 = vshrl.u32 %v282, 16
  %v287 = vshll.u32 %v283, 16
  %v288 = vshrl.u32 %v283, 16
  %vm289 = vc.u32 %v281, %v285
  %v290 = vsel %vm289, 1, 0
  %v291 = vadd.s32 %v281, %v285
  %v292 = vadd.s32 %v284, %v290
  %vm293 = vc.u32 %v291, %v287
  %v294 = vsel %vm293, 1, 0
  %v295 = vadd.s32 %v291, %v287
  %v296 = vadd.s32 %v292, %v294
  %v297 = vadd.s32 %v296, %v286
  %v298 = vadd.s32 %v297, %v288
  %v299 = vmul.u32 %v254, %v245
  %v300 = vadd.s32 %v276, %v295
  %vm301 = vc.u32 %v276, %v295
  %v302 = vadd.s32 %v298, 1
  %v303 = vsel %vm301, %v302, %v298
  %v304 = vadd.s32 %v299, %v303
  %v305 = vadd.s32 %v304, 536870912
  %v306 = vshrl.u32 %v305, 30
  %v307 = vshll.u32 %v306, 30
  %v308 = vsub.s32 %v304, %v307
  %vm309 = vcmp.lt.s32.totalorder %v308, 0
  %v310 = vsub.s32 0, %v308
  %v311 = vsel %vm309, %v310, %v308
  %v312 = vclz %v311
  %v313 = vsub.s32 %v312, 2
  %vm314 = vcmp.gt.s32.totalorder 0, %v313
  %v315 = vsel %vm314, 0, %v313
  %v316 = vsub.s32 32, %v315
  %v317 = vshll.u32 %v308, %v315
  %v318 = vshrl.u32 %v300, %v316
  %v319 = vor.u32 %v317, %v318
  %v320 = vsub.s32 4294967266, %v315
  %v321 = vadd.s32 %v320, 127
  %v322 = vshll.u32 %v321, 23
  %v323 = vor.u32 4788187, %v322
  %v324 = vand.u32 2147483647, %v323
  %v326 = vcvt.s32.f32 %v319
  %v327 = vmul.f32 %v326, %v324
  %v328 = vxor.u32 %v327, 2147483648
  %v329 = vsel %vm208, %v328, %v327
  %v330 = vsub.s32 4, %v306
  %v331 = vsel %vm208, %v330, %v306
  %v332 = vsel %vm207, %v47, %v329
  %v333 = vsel %vm207, 0, %v331
  %v334 = vmul.f32 %v332, %v332
  %v335 = vmul.f32 %v334, -0.001358992
  %v336 = vadd.f32 %v335, 0.041655596
  %v337 = vmul.f32 %v334, %v336
  %v338 = vadd.f32 %v337, -0.4999988
  %v339 = vmul.f32 %v334, %v338
  %v340 = vadd.f32 1.0, %v339
  %v341 = vmul.f32 %v332, %v332
  %v342 = vmul.f32 %v341, -0.00019511016
  %v343 = vadd.f32 %v342, 0.008332121
  %v344 = vmul.f32 %v341, %v343
  %v345 = vadd.f32 %v344, -0.16666654
  %v346 = vmul.f32 %v341, %v345
  %v347 = vadd.f32 %v346, 1.0
  %v348 = vmul.f32 %v347, %v332
  %vm349 = vweird.f32 %v47
  %v350 = vadd.s32 %v333, 3
  %v351 = vand.u32 %v350, 3
  %vm352 = vcmp.lt.s32.totalorder %v351, 2
  %vm353 = vcmp.eq.s32.totalorder %v351, 0
  %v354 = vxor.u32 %v348, 2147483648
  %v355 = vsel %vm353, %v340, %v354
  %vm356 = vcmp.eq.s32.totalorder %v351, 2
  %v357 = vxor.u32 %v340, 2147483648
  %v358 = vsel %vm356, %v357, %v348
  %v359 = vsel %vm352, %v355, %v358
  %v360 = vsel %vm349, nan, %v359
  %v361 = vand.u32 2147483647, %v49
  %vm362 = vcmp.le.f32.partialorder %v361, 0.7853982
  %vm363 = vcmp.lt.s32.totalorder %v49, 0
  %v364 = vand.u32 %v49, 2139095040
  %v365 = vshrl.u32 %v364, 23
  %v366 = vsub.s32 %v365, 127
  %v367 = vand.u32 2147483647, %v49
  %v368 = vand.u32 %v367, 8388607
  %v369 = vor.u32 %v368, 8388608
  %v370 = vsub.s32 0, %v369
  %v371 = vadd.s32 %v366, 1
  %vm372 = vcmp.gt.s32.totalorder %v371, 0
  %v373 = vsel %vm372, %v371, 0
  %v374 = vshrl.u32 %v373, 5
  %v375 = vand.u32 %v373, 31
  %v376 = vsub.s32 32, %v375
  %v377 = vshrl.u32 683565275, %v376
  %v378 = vshll.u32 683565275, %v375
  %v379 = vshrl.u32 2475754826, %v376
  %v380 = vor.u32 %v378, %v379
  %v381 = vshll.u32 2475754826, %v375
  %v382 = vshrl.u32 2131351028, %v376
  %v383 = vor.u32 %v381, %v382
  %v384 = vshll.u32 2131351028, %v375
  %v385 = vshrl.u32 2102212464, %v376
  %v386 = vor.u32 %v384, %v385
  %v387 = vshll.u32 2102212464, %v375
  %v388 = vshrl.u32 920167782, %v376
  %v389 = vor.u32 %v387, %v388
  %v390 = vshll.u32 920167782, %v375
  %v391 = vshrl.u32 1326507024, %v376
  %v392 = vor.u32 %v390, %v391
  %vm393 = vcmp.lt.s32.totalorder %v374, 1
  %vm394 = vcmp.lt.s32.totalorder %v374, 2
  %vm395 = vcmp.lt.s32.totalorder %v374, 3
  %vm396 = vcmp.lt.s32.totalorder %v374, 4
  %v397 = vsel %vm393, %v377, %v380
  %v398 = vsel %vm396, %v386, 2102212464
  %v399 = vsel %vm395, %v383, %v398
  %v400 = vsel %vm394, %v397, %v399
  %v401 = vsel %vm393, %v380, %v383
  %v402 = vsel %vm396, %v389, 920167782
  %v403 = vsel %vm395, %v386, %v402
  %v404 = vsel %vm394, %v401, %v403
  %v405 = vsel %vm393, %v383, %v386
  %v406 = vsel %vm396, %v392, 1326507024
  %v407 = vsel %vm395, %v389, %v406
  %v408 = vsel %vm394, %v405, %v407
  %v409 = vshll.u32 %v369, 8
  %v410 = vand.u32 %v409, 65535
  %v411 = vshrl.u32 %v409, 16
  %v412 = vand.u32 %v408, 65535
  %v413 = vshrl.u32 %v408, 16
  %v414 = vmul.u32 %v410, %v412
  %v415 = vmul.u32 %v410, %v413
  %v416 = vmul.u32 %v411, %v412
  %v417 = vmul.u32 %v411, %v413
  %v418 = vshll.u32 %v415, 16
  %v419 = vshrl.u32 %v415, 16
  %v420 = vshll.u32 %v416, 16
  %v421 = vshrl.u32 %v416, 16
  %vm422 = vc.u32 %v414, %v418
  %v423 = vsel %vm422, 1, 0
  %v424 = vadd.s32 %v414, %v418
  %v425 = vadd.s32 %v417, %v423
  %vm426 = vc.u32 %v424, %v420
  %v427 = vsel %vm426, 1, 0
  %v428 = vadd.s32 %v424, %v420
  %v429 = vadd.s32 %v425, %v427
  %v430 = vadd.s32 %v429, %v419
  %v431 = vadd.s32 %v430, %v421
  %v432 = vand.u32 %v409, 65535
  %v433 = vshrl.u32 %v409, 16
  %v434 = vand.u32 %v404, 65535
  %v435 = vshrl.u32 %v404, 16
  %v436 = vmul.u32 %v432, %v434
  %v437 = vmul.u32 %v432, %v435
  %v438 = vmul.u32 %v433, %v434
  %v439 = vmul.u32 %v433, %v435
  %v440 = vshll.u32 %v437, 16
  %v441 = vshrl.u32 %v437, 16
  %v442 = vshll.u32 %v438, 16
  %v443 = vshrl.u32 %v438, 16
  %vm444 = vc.u32 %v436, %v440
  %v445 = vsel %vm444, 1, 0
  %v446 = vadd.s32 %v436, %v440
  %v447 = vadd.s32 %v439, %v445
  %vm448 = vc.u32 %v446, %v442
  %v449 = vsel %vm448, 1, 0
  %v450 = vadd.s32 %v446, %v442
  %v451 = vadd.s32 %v447, %v449
  %v452 = vadd.s32 %v451, %v441
  %v453 = vadd.s32 %v452, %v443
  %v454 = vmul.u32 %v409, %v400
  %v455 = vadd.s32 %v431, %v450
  %vm456 = vc.u32 %v431, %v450
  %v457 = vadd.s32 %v453, 1
  %v458 = vsel %vm456, %v457, %v453
  %v459 = vadd.s32 %v454, %v458
  %v460 = vadd.s32 %v459, 536870912
  %v461 = vshrl.u32 %v460, 30
  %v462 = vshll.u32 %v461, 30
  %v463 = vsub.s32 %v459, %v462
  %vm464 = vcmp.lt.s32.totalorder %v463, 0
  %v465 = vsub.s32 0, %v463
  %v466 = vsel %vm464, %v465, %v463
  %v467 = vclz %v466
  %v468 = vsub.s32 %v467, 2
  %vm469 = vcmp.gt.s32.totalorder 0, %v468
  %v470 = vsel %vm469, 0, %v468
  %v471 = vsub.s32 32, %v470
  %v472 = vshll.u32 %v463, %v470
  %v473 = vshrl.u32 %v455, %v471
  %v474 = vor.u32 %v472, %v473
  %v475 = vsub.s32 4294967266, %v470
  %v476 = vadd.s32 %v475, 127
  %v477 = vshll.u32 %v476, 23
  %v478 = vor.u32 4788187, %v477
  %v479 = vand.u32 2147483647, %v478
  %v481 = vcvt.s32.f32 %v474
  %v482 = vmul.f32 %v481, %v479
  %v483 = vxor.u32 %v482, 2147483648
  %v484 = vsel %vm363, %v483, %v482
  %v485 = vsub.s32 4, %v461
  %v486 = vsel %vm363, %v485, %v461
  %v487 = vsel %vm362, %v49, %v484
  %v488 = vsel %vm362, 0, %v486
  %v489 = vmul.f32 %v487, %v487
  %v490 = vmul.f32 %v489, -0.001358992
  %v491 = vadd.f32 %v490, 0.041655596
  %v492 = vmul.f32 %v489, %v491
  %v493 = vadd.f32 %v492, -0.4999988
  %v494 = vmul.f32 %v489, %v493
  %v495 = vadd.f32 1.0, %v494
  %v496 = vmul.f32 %v487, %v487
  %v497 = vmul.f32 %v496, -0.00019511016
  %v498 = vadd.f32 %v497, 0.008332121
  %v499 = vmul.f32 %v496, %v498
  %v500 = vadd.f32 %v499, -0.16666654
  %v501 = vmul.f32 %v496, %v500
  %v502 = vadd.f32 %v501, 1.0
  %v503 = vmul.f32 %v502, %v487
  %vm504 = vweird.f32 %v49
  %v505 = vadd.s32 %v488, 3
  %v506 = vand.u32 %v505, 3
  %vm507 = vcmp.lt.s32.totalorder %v506, 2
  %vm508 = vcmp.eq.s32.totalorder %v506, 0
  %v509 = vxor.u32 %v503, 2147483648
  %v510 = vsel %vm508, %v495, %v509
  %vm511 = vcmp.eq.s32.totalorder %v506, 2
  %v512 = vxor.u32 %v495, 2147483648
  %v513 = vsel %vm511, %v512, %v503
  %v514 = vsel %vm507, %v510, %v513
  %v515 = vsel %vm504, nan, %v514
  %v516 = vand.u32 2147483647, %v50
  %vm517 = vcmp.le.f32.partialorder %v516, 0.7853982
  %vm518 = vcmp.lt.s32.totalorder %v50, 0
  %v519 = vand.u32 %v50, 2139095040
  %v520 = vshrl.u32 %v519, 23
  %v521 = vsub.s32 %v520, 127
  %v522 = vand.u32 2147483647, %v50
  %v523 = vand.u32 %v522, 8388607
  %v524 = vor.u32 %v523, 8388608
  %v525 = vsub.s32 0, %v524
  %v526 = vadd.s32 %v521, 1
  %vm527 = vcmp.gt.s32.totalorder %v526, 0
  %v528 = vsel %vm527, %v526, 0
  %v529 = vshrl.u32 %v528, 5
  %v530 = vand.u32 %v528, 31
  %v531 = vsub.s32 32, %v530
  %v532 = vshrl.u32 683565275, %v531
  %v533 = vshll.u32 683565275, %v530
  %v534 = vshrl.u32 2475754826, %v531
  %v535 = vor.u32 %v533, %v534
  %v536 = vshll.u32 2475754826, %v530
  %v537 = vshrl.u32 2131351028, %v531
  %v538 = vor.u32 %v536, %v537
  %v539 = vshll.u32 2131351028, %v530
  %v540 = vshrl.u32 2102212464, %v531
  %v541 = vor.u32 %v539, %v540
  %v542 = vshll.u32 2102212464, %v530
  %v543 = vshrl.u32 920167782, %v531
  %v544 = vor.u32 %v542, %v543
  %v545 = vshll.u32 920167782, %v530
  %v546 = vshrl.u32 1326507024, %v531
  %v547 = vor.u32 %v545, %v546
  %vm548 = vcmp.lt.s32.totalorder %v529, 1
  %vm549 = vcmp.lt.s32.totalorder %v529, 2
  %vm550 = vcmp.lt.s32.totalorder %v529, 3
  %vm551 = vcmp.lt.s32.totalorder %v529, 4
  %v552 = vsel %vm548, %v532, %v535
  %v553 = vsel %vm551, %v541, 2102212464
  %v554 = vsel %vm550, %v538, %v553
  %v555 = vsel %vm549, %v552, %v554
  %v556 = vsel %vm548, %v535, %v538
  %v557 = vsel %vm551, %v544, 920167782
  %v558 = vsel %vm550, %v541, %v557
  %v559 = vsel %vm549, %v556, %v558
  %v560 = vsel %vm548, %v538, %v541
  %v561 = vsel %vm551, %v547, 1326507024
  %v562 = vsel %vm550, %v544, %v561
  %v563 = vsel %vm549, %v560, %v562
  %v564 = vshll.u32 %v524, 8
  %v565 = vand.u32 %v564, 65535
  %v566 = vshrl.u32 %v564, 16
  %v567 = vand.u32 %v563, 65535
  %v568 = vshrl.u32 %v563, 16
  %v569 = vmul.u32 %v565, %v567
  %v570 = vmul.u32 %v565, %v568
  %v571 = vmul.u32 %v566, %v567
  %v572 = vmul.u32 %v566, %v568
  %v573 = vshll.u32 %v570, 16
  %v574 = vshrl.u32 %v570, 16
  %v575 = vshll.u32 %v571, 16
  %v576 = vshrl.u32 %v571, 16
  %vm577 = vc.u32 %v569, %v573
  %v578 = vsel %vm577, 1, 0
  %v579 = vadd.s32 %v569, %v573
  %v580 = vadd.s32 %v572, %v578
  %vm581 = vc.u32 %v579, %v575
  %v582 = vsel %vm581, 1, 0
  %v583 = vadd.s32 %v579, %v575
  %v584 = vadd.s32 %v580, %v582
  %v585 = vadd.s32 %v584, %v574
  %v586 = vadd.s32 %v585, %v576
  %v587 = vand.u32 %v564, 65535
  %v588 = vshrl.u32 %v564, 16
  %v589 = vand.u32 %v559, 65535
  %v590 = vshrl.u32 %v559, 16
  %v591 = vmul.u32 %v587, %v589
  %v592 = vmul.u32 %v587, %v590
  %v593 = vmul.u32 %v588, %v589
  %v594 = vmul.u32 %v588, %v590
  %v595 = vshll.u32 %v592, 16
  %v596 = vshrl.u32 %v592, 16
  %v597 = vshll.u32 %v593, 16
  %v598 = vshrl.u32 %v593, 16
  %vm599 = vc.u32 %v591, %v595
  %v600 = vsel %vm599, 1, 0
  %v601 = vadd.s32 %v591, %v595
  %v602 = vadd.s32 %v594, %v600
  %vm603 = vc.u32 %v601, %v597
  %v604 = vsel %vm603, 1, 0
  %v605 = vadd.s32 %v601, %v597
  %v606 = vadd.s32 %v602, %v604
  %v607 = vadd.s32 %v606, %v596
  %v608 = vadd.s32 %v607, %v598
  %v609 = vmul.u32 %v564, %v555
  %v610 = vadd.s32 %v586, %v605
  %vm611 = vc.u32 %v586, %v605
  %v612 = vadd.s32 %v608, 1
  %v613 = vsel %vm611, %v612, %v608
  %v614 = vadd.s32 %v609, %v613
  %v615 = vadd.s32 %v614, 536870912
  %v616 = vshrl.u32 %v615, 30
  %v617 = vshll.u32 %v616, 30
  %v618 = vsub.s32 %v614, %v617
  %vm619 = vcmp.lt.s32.totalorder %v618, 0
  %v620 = vsub.s32 0, %v618
  %v621 = vsel %vm619, %v620, %v618
  %v622 = vclz %v621
  %v623 = vsub.s32 %v622, 2
  %vm624 = vcmp.gt.s32.totalorder 0, %v623
  %v625 = vsel %vm624, 0, %v623
  %v626 = vsub.s32 32, %v625
  %v627 = vshll.u32 %v618, %v625
  %v628 = vshrl.u32 %v610, %v626
  %v629 = vor.u32 %v627, %v628
  %v630 = vsub.s32 4294967266, %v625
  %v631 = vadd.s32 %v630, 127
  %v632 = vshll.u32 %v631, 23
  %v633 = vor.u32 4788187, %v632
  %v634 = vand.u32 2147483647, %v633
  %v636 = vcvt.s32.f32 %v629
  %v637 = vmul.f32 %v636, %v634
  %v638 = vxor.u32 %v637, 2147483648
  %v639 = vsel %vm518, %v638, %v637
  %v640 = vsub.s32 4, %v616
  %v641 = vsel %vm518, %v640, %v616
  %v642 = vsel %vm517, %v50, %v639
  %v643 = vsel %vm517, 0, %v641
  %v644 = vmul.f32 %v642, %v642
  %v645 = vmul.f32 %v644, -0.001358992
  %v646 = vadd.f32 %v645, 0.041655596
  %v647 = vmul.f32 %v644, %v646
  %v648 = vadd.f32 %v647, -0.4999988
  %v649 = vmul.f32 %v644, %v648
  %v650 = vadd.f32 1.0, %v649
  %v651 = vmul.f32 %v642, %v642
  %v652 = vmul.f32 %v651, -0.00019511016
  %v653 = vadd.f32 %v652, 0.008332121
  %v654 = vmul.f32 %v651, %v653
  %v655 = vadd.f32 %v654, -0.16666654
  %v656 = vmul.f32 %v651, %v655
  %v657 = vadd.f32 %v656, 1.0
  %v658 = vmul.f32 %v657, %v642
  %vm659 = vweird.f32 %v50
  %v660 = vadd.s32 %v643, 3
  %v661 = vand.u32 %v660, 3
  %vm662 = vcmp.lt.s32.totalorder %v661, 2
  %vm663 = vcmp.eq.s32.totalorder %v661, 0
  %v664 = vxor.u32 %v658, 2147483648
  %v665 = vsel %vm663, %v650, %v664
  %vm666 = vcmp.eq.s32.totalorder %v661, 2
  %v667 = vxor.u32 %v650, 2147483648
  %v668 = vsel %vm666, %v667, %v658
  %v669 = vsel %vm662, %v665, %v668
  %v670 = vsel %vm659, nan, %v669
  %v671 = vmul.f32 %v205, 2.0
  %v672 = vmul.f32 %v360, 2.0
  %v675 = vrot.slane %v205, 3
  %v676 = vrot.slane %v360, 3
  %v679 = vmul.f32 %v671, %v675
  %v680 = vmul.f32 %v672, %v676
  %v681 = vmul.f32 %v205, %v205
  %v682 = vmul.f32 %v360, %v360
  %v683 = vmul.f32 %v681, 2.0
  %v684 = vmul.f32 %v682, 2.0
  %v685 = vsub.f32 1.0, %v683
  %v686 = vsub.f32 1.0, %v684
  %v687 = vmul.f32 %v679, 2.0
  %v688 = vmul.f32 %v680, 2.0
  %v689 = vmul.f32 %v687, %v685
  %v690 = vmul.f32 %v688, %v686
  %v691 = vmul.f32 %v679, %v679
  %v692 = vmul.f32 %v680, %v680
  %v693 = vmul.f32 %v691, 2.0
  %v694 = vmul.f32 %v692, 2.0
  %v695 = vsub.f32 1.0, %v693
  %v696 = vsub.f32 1.0, %v694
  %v697 = vmul.f32 %v689, 2.0
  %v698 = vmul.f32 %v690, 2.0
  %v699 = vmul.f32 %v697, %v695
  %v700 = vmul.f32 %v698, %v696
  %v701 = vmul.f32 %v689, %v689
  %v702 = vmul.f32 %v690, %v690
  %v703 = vmul.f32 %v701, 2.0
  %v704 = vmul.f32 %v702, 2.0
  %v705 = vsub.f32 1.0, %v703
  %v706 = vsub.f32 1.0, %v704
  %v707 = vmul.f32 %v699, 2.0
  %v708 = vmul.f32 %v700, 2.0
  %v709 = vmul.f32 %v707, %v705
  %v710 = vmul.f32 %v708, %v706
  %v711 = vmul.f32 %v699, %v699
  %v712 = vmul.f32 %v700, %v700
  %v713 = vmul.f32 %v711, 2.0
  %v714 = vmul.f32 %v712, 2.0
  %v715 = vsub.f32 1.0, %v713
  %v716 = vsub.f32 1.0, %v714
  %v717 = vmul.f32 %v515, 2.0
  %v718 = vmul.f32 %v670, 2.0
  %v721 = vrot.slane %v515, 3
  %v722 = vrot.slane %v670, 3
  %v725 = vmul.f32 %v671, %v721
  %v726 = vmul.f32 %v672, %v722
  %v727 = vmul.f32 %v717, %v721
  %v728 = vmul.f32 %v718, %v722
  %v729 = vmul.f32 %v515, %v515
  %v730 = vmul.f32 %v670, %v670
  %v731 = vmul.f32 %v729, 2.0
  %v732 = vmul.f32 %v730, 2.0
  %v733 = vsub.f32 1.0, %v731
  %v734 = vsub.f32 1.0, %v732
  %v735 = vmul.f32 %v725, 2.0
  %v736 = vmul.f32 %v726, 2.0
  %v737 = vmul.f32 %v727, 2.0
  %v738 = vmul.f32 %v728, 2.0
  %v739 = vmul.f32 %v735, %v685
  %v740 = vmul.f32 %v736, %v686
  %v741 = vmul.f32 %v737, %v733
  %v742 = vmul.f32 %v738, %v734
  %v743 = vmul.f32 %v725, %v725
  %v744 = vmul.f32 %v726, %v726
  %v745 = vmul.f32 %v727, %v727
  %v746 = vmul.f32 %v728, %v728
  %v747 = vmul.f32 %v743, 2.0
  %v748 = vmul.f32 %v744, 2.0
  %v749 = vmul.f32 %v745, 2.0
  %v750 = vmul.f32 %v746, 2.0
  %v751 = vsub.f32 1.0, %v747
  %v752 = vsub.f32 1.0, %v748
  %v753 = vsub.f32 1.0, %v749
  %v754 = vsub.f32 1.0, %v750
  %v755 = vmul.f32 %v739, 2.0
  %v756 = vmul.f32 %v740, 2.0
  %v757 = vmul.f32 %v741, 2.0
  %v758 = vmul.f32 %v742, 2.0
  %v759 = vmul.f32 %v755, %v751
  %v760 = vmul.f32 %v756, %v752
  %v761 = vmul.f32 %v757, %v753
  %v762 = vmul.f32 %v758, %v754
  %v763 = vmul.f32 %v739, %v739
  %v764 = vmul.f32 %v740, %v740
  %v765 = vmul.f32 %v741, %v741
  %v766 = vmul.f32 %v742, %v742
  %v767 = vmul.f32 %v763, 2.0
  %v768 = vmul.f32 %v764, 2.0
  %v769 = vmul.f32 %v765, 2.0
  %v770 = vmul.f32 %v766, 2.0
  %v771 = vsub.f32 1.0, %v767
  %v772 = vsub.f32 1.0, %v768
  %v773 = vsub.f32 1.0, %v769
  %v774 = vsub.f32 1.0, %v770
  %v775 = vmul.f32 %v759, 2.0
  %v776 = vmul.f32 %v760, 2.0
  %v777 = vmul.f32 %v761, 2.0
  %v778 = vmul.f32 %v762, 2.0
  %v779 = vmul.f32 %v775, %v771
  %v780 = vmul.f32 %v776, %v772
  %v781 = vmul.f32 %v777, %v773
  %v782 = vmul.f32 %v778, %v774
  %v783 = vmul.f32 %v759, %v759
  %v784 = vmul.f32 %v760, %v760
  %v785 = vmul.f32 %v761, %v761
  %v786 = vmul.f32 %v762, %v762
  %v787 = vmul.f32 %v783, 2.0
  %v788 = vmul.f32 %v784, 2.0
  %v789 = vmul.f32 %v785, 2.0
  %v790 = vmul.f32 %v786, 2.0
  %v791 = vsub.f32 1.0, %v787
  %v792 = vsub.f32 1.0, %v788
  %v793 = vsub.f32 1.0, %v789
  %v794 = vsub.f32 1.0, %v790
  %795 = vst [vmem:[#allocation1] ss:$2 sm:$0xff] %v8
  %v796 = vld.sshfl [vmem:[#allocation1] sm:$0xff pattern:$0x75316420]
  %v797 = vld.sshfl [vmem:[#allocation1 + $0x8] sm:$0xff pattern:$0x75316420]
  %v800 = vrot.slane %v205, 5
  %v801 = vrot.slane %v360, 5
  %v806 = vrot.slane %v679, 7
  %v807 = vrot.slane %v680, 7
  %v812 = vrot.slane %v685, 4
  %v813 = vrot.slane %v686, 4
  %v818 = vrot.slane %v689, 1
  %v819 = vrot.slane %v690, 1
  %v824 = vrot.slane %v695, 6
  %v825 = vrot.slane %v696, 6
  %v830 = vrot.slane %v699, 3
  %v831 = vrot.slane %v700, 3
  %v836 = vrot.slane %v709, 5
  %v837 = vrot.slane %v710, 5
  %v842 = vrot.slane %v715, 2
  %v843 = vrot.slane %v716, 2
  %v846 = vrot.slane %v515, 5
  %v847 = vsel %vm42, %v800, %v846
  %v848 = vrot.slane %v670, 5
  %v849 = vsel %vm42, %v801, %v848
  %v858 = vrot.slane %v725, 7
  %v859 = vrot.slane %v726, 7
  %v860 = vrot.slane %v727, 7
  %v861 = vsel %vm48, %v858, %v860
  %v862 = vrot.slane %v728, 7
  %v863 = vsel %vm48, %v859, %v862
  %vm870 = vcmask 1043456
  %v871 = vrot.slane %v733, 4
  %v872 = vsel %vm870, %v812, %v871
  %v873 = vrot.slane %v734, 4
  %v874 = vsel %vm870, %v813, %v873
  %vm881 = vcmask 1046528
  %v882 = vrot.slane %v739, 1
  %v883 = vrot.slane %v741, 1
  %v884 = vsel %vm881, %v882, %v883
  %v885 = vrot.slane %v740, 1
  %v886 = vrot.slane %v742, 1
  %v887 = vsel %vm881, %v885, %v886
  %v890 = vsel %vm42, %v796, %v800
  %v891 = vsel %vm42, %v797, %v801
  %v892 = vsel %vm45, %v890, %v800
  %v893 = vsel %vm45, %v891, %v801
  %v894 = vsel %vm48, %v800, %v806
  %v895 = vsel %vm48, %v801, %v807
  %v896 = vsel %vm870, %v894, %v812
  %v897 = vsel %vm870, %v895, %v813
  %v898 = vsel %vm881, %v896, %v818
  %v899 = vsel %vm881, %v897, %v819
  %vm900 = vcmask 1041408
  %v901 = vsel %vm900, %v818, %v824
  %v902 = vsel %vm900, %v819, %v825
  %vm903 = vcmask 1044480
  %v904 = vsel %vm903, %v901, %v830
  %v905 = vsel %vm903, %v902, %v831
  %v906 = vsel %vm42, %v705, %v836
  %v907 = vsel %vm42, %v706, %v837
  %v908 = vsel %vm45, %v906, %v842
  %v909 = vsel %vm45, %v907, %v843
  %v910 = vsel %vm48, %v842, %v847
  %v911 = vsel %vm48, %v843, %v849
  %v912 = vsel %vm870, %v910, %v846
  %v913 = vsel %vm870, %v911, %v848
  %v914 = vsel %vm881, %v912, %v858
  %v915 = vsel %vm881, %v913, %v859
  %v916 = vsel %vm900, %v861, %v872
  %v917 = vsel %vm900, %v863, %v874
  %v918 = vsel %vm903, %v916, %v884
  %v919 = vsel %vm903, %v917, %v887
  %v924 = vrot.slane %v751, 6
  %v925 = vrot.slane %v753, 6
  %v926 = vsel %vm900, %v924, %v925
  %v927 = vrot.slane %v752, 6
  %v928 = vrot.slane %v754, 6
  %v929 = vsel %vm900, %v927, %v928
  %v936 = vrot.slane %v759, 3
  %v937 = vrot.slane %v761, 3
  %v938 = vsel %vm903, %v936, %v937
  %v939 = vrot.slane %v760, 3
  %v940 = vrot.slane %v762, 3
  %v941 = vsel %vm903, %v939, %v940
  %v948 = vrot.slane %v779, 5
  %v949 = vrot.slane %v781, 5
  %v950 = vsel %vm42, %v948, %v949
  %v951 = vrot.slane %v780, 5
  %v952 = vrot.slane %v782, 5
  %v953 = vsel %vm42, %v951, %v952
  %v960 = vrot.slane %v791, 2
  %v961 = vrot.slane %v793, 2
  %v962 = vsel %vm45, %v960, %v961
  %v963 = vrot.slane %v792, 2
  %v964 = vrot.slane %v794, 2
  %v965 = vsel %vm45, %v963, %v964
  %v968 = vsel %vm42, %v926, %v938
  %v969 = vsel %vm42, %v929, %v941
  %v970 = vsel %vm45, %v968, %v771
  %v971 = vsel %vm45, %v969, %v772
  %v972 = vsel %vm48, %v773, %v950
  %v973 = vsel %vm48, %v774, %v953
  %v974 = vsel %vm870, %v972, %v962
  %v975 = vsel %vm870, %v973, %v965
  %v976 = vsel %vm881, %v974, 0.0
  %v977 = vsel %vm881, %v975, 0.0
  %978 = vst [vmem:[%s1] sm:$0xff] %v892
  %979 = vst [vmem:[%s1 + $0x8] sm:$0xff] %v893
  %980 = vst [vmem:[%s1 + $0x10] sm:$0xff] %v898
  %981 = vst [vmem:[%s1 + $0x18] sm:$0xff] %v899
  %982 = vst [vmem:[%s1 + $0x20] sm:$0xff] %v904
  %983 = vst [vmem:[%s1 + $0x28] sm:$0xff] %v905
  %984 = vst [vmem:[%s1 + $0x30] sm:$0xff] %v908
  %985 = vst [vmem:[%s1 + $0x38] sm:$0xff] %v909
  %986 = vst [vmem:[%s1 + $0x40] sm:$0xff] %v914
  %987 = vst [vmem:[%s1 + $0x48] sm:$0xff] %v915
  %988 = vst [vmem:[%s1 + $0x50] sm:$0xff] %v918
  %989 = vst [vmem:[%s1 + $0x58] sm:$0xff] %v919
  %990 = vst [vmem:[%s1 + $0x60] sm:$0xff] %v970
  %991 = vst [vmem:[%s1 + $0x68] sm:$0xff] %v971
  %992 = vst [vmem:[%s1 + $0x70] sm:$0xff] %v976
  %993 = vst [vmem:[%s1 + $0x78] sm:$0xff] %v977
  // Predicated region
  $region6: #{positional_encoder.1} parent=0 // pred_check
    _
  $region7: #{positional_encoder.1} parent=0 // pred_check_branch
    %995 = sbr.rel (0) target = $region9
  $region8: #{positional_encoder.1} parent=0 // pred_region
    _
  $region9: #{positional_encoder.1} parent=0 // pred_fallthru
    _
  // Predicated region
  $region10: #{positional_encoder.1} parent=0 // pred_check
    _
  $region11: #{positional_encoder.1} parent=0 // pred_check_branch
    %997 = sbr.rel (0) target = $region13
  $region12: #{positional_encoder.1} parent=0 // pred_region
    _
  $region13: #{positional_encoder.1} parent=0 // pred_fallthru
    _

</llo_original>
